<compile_context>
chip_gen: v7x
topology: tpu7x:2x2x1
jax: 0.10.0
libtpu: 0.0.40
codegen_flags: <defaults>
</compile_context>

<pallas_src>
from functools import partial

import jax
import jax.numpy as jnp
from jax.experimental import pallas as pl
from jax.experimental.pallas import tpu as pltpu

UPPER_BOUND = 1.0                         # module __init__ arg
LANE = 128
_TARGET_BLOCK_BYTES = 4 * 1024 * 1024     # ~4 MiB per buffer per block
_VMEM_LIMIT_BYTES = 32 * 1024 * 1024      # 4 bufs x 4 MiB = 16 MiB + headroom (< v7x 64 MiB)
_WIDTHS = (2048, 1024, 512, 256, LANE)    # candidate lane-dense widths (multiples of 128)


def _soft_upper_bound_kernel(x_ref, o_ref, *, upper_bound):
    # softplus(z) = max(z, 0) + log1p(exp(-|z|)) is overflow-safe and matches
    # torch's thresholded softplus to rounding; compute in f32 (mem-bound, free).
    x = x_ref[...].astype(jnp.float32)
    z = upper_bound - x
    sp = jnp.maximum(z, 0.0) + jnp.log1p(jnp.exp(-jnp.abs(z)))
    o_ref[...] = (upper_bound - sp).astype(o_ref.dtype)


def _softplus_stable(z):
    return jnp.maximum(z, 0.0) + jnp.log1p(jnp.exp(-jnp.abs(z)))


def _soft_upper_bound_2d(x2d, upper_bound):
    """Tiled elementwise kernel over a lane-dense (rows, width) slab."""
    rows, width = x2d.shape
    dtype = x2d.dtype
    itemsize = jnp.dtype(dtype).itemsize
    sub = max(8, 32 // itemsize)          # min sublane tile: f32->8, bf16->16, int8->32

    target_rows = max(sub, (_TARGET_BLOCK_BYTES // (width * itemsize)) // sub * sub)
    if rows >= 2 * target_rows:
        row_tile = target_rows            # large: ~4 MiB blocks, >= 2 grid steps
    elif rows >= 4 * sub:
        # medium: >= 4 blocks so each v7x core gets >= 2 pipeline steps
        quarter = pl.cdiv(rows, 4)
        row_tile = ((quarter + sub - 1) // sub) * sub
    elif rows >= 2 * sub:
        half = pl.cdiv(rows, 2)
        row_tile = ((half + sub - 1) // sub) * sub
    else:
        row_tile = rows                   # tiny: single full-extent block

    grid = (pl.cdiv(rows, row_tile),)     # Pallas masks the partial last block

    n = rows * width
    cost = pl.CostEstimate(flops=6 * n, transcendentals=2 * n,
                           bytes_accessed=2 * n * itemsize)

    kernel = partial(_soft_upper_bound_kernel, upper_bound=float(upper_bound))
    return pl.pallas_call(
        kernel,
        out_shape=jax.ShapeDtypeStruct((rows, width), dtype),
        grid_spec=pltpu.PrefetchScalarGridSpec(
            num_scalar_prefetch=0,
            grid=grid,
            in_specs=[pl.BlockSpec((row_tile, width), lambda i: (i, 0))],
            out_specs=pl.BlockSpec((row_tile, width), lambda i: (i, 0)),
        ),
        compiler_params=pltpu.CompilerParams(
            dimension_semantics=("parallel",),
            vmem_limit_bytes=_VMEM_LIMIT_BYTES,
        ),
        cost_estimate=cost,
    )(x2d)


def soft_upper_bound(x, upper_bound=UPPER_BOUND):
    """Apply SoftUpperBound elementwise via a Pallas TPU kernel."""
    orig_shape = x.shape
    dtype = x.dtype
    n = x.size
    if n == 0:
        return x

    itemsize = jnp.dtype(dtype).itemsize
    sub = max(8, 32 // itemsize)

    flat = x.reshape(-1)                  # free reshape of contiguous data
    n_main = (n // LANE) * LANE
    tail = n - n_main

    if n_main == 0:
        # Fewer than 128 elements: a kernel launch is pure overhead.
        ub = jnp.asarray(upper_bound, dtype=jnp.float32)
        y = (ub - _softplus_stable(ub - flat.astype(jnp.float32))).astype(dtype)
        return y.reshape(orig_shape)

    # Widest lane width (multiple of 128) dividing the aligned prefix that still
    # leaves >= 4*sub rows (pipelining / megacore); otherwise 128 lanes to
    # maximize rows. Lane-density is identical for any multiple of 128.
    width = LANE
    for w in _WIDTHS:
        if n_main % w == 0 and (n_main // w) >= 4 * sub:
            width = w
            break

    main = _soft_upper_bound_2d(
        flat[:n_main].reshape(n_main // width, width), upper_bound
    ).reshape(-1)

    if tail == 0:
        return main.reshape(orig_shape)

    # TODO(synk): the concatenate re-copies the prefix output; for very large
    # unaligned inputs, write both pieces into one preallocated buffer instead.
    ub = jnp.asarray(upper_bound, dtype=jnp.float32)
    tail_y = (ub - _softplus_stable(ub - flat[n_main:].astype(jnp.float32))).astype(dtype)
    return jnp.concatenate([main, tail_y]).reshape(orig_shape)


def soft_upper_bound_ref(x, upper_bound=UPPER_BOUND):
    # Pure-JAX reference (f32 internal math, like the kernel).
    ub = jnp.asarray(upper_bound, dtype=jnp.float32)
    return (ub - jax.nn.softplus(ub - x.astype(jnp.float32))).astype(x.dtype)


if __name__ == "__main__":
    key = jax.random.PRNGKey(0)

    # Small NCHW input consistent with the module; values spread so both
    # softplus regimes (large positive z and log1p(exp(.))) are exercised.
    x = jax.random.normal(key, (2, 4, 16, 16), dtype=jnp.float32) * 10.0
    y = soft_upper_bound(x)
    jax.block_until_ready(y)
    assert y.shape == x.shape and y.dtype == x.dtype
    assert jnp.allclose(y, soft_upper_bound_ref(x), atol=1e-5, rtol=1e-5)

    # Medium input -> >= 4 blocks on the "parallel" grid (pipelined on v7x).
    x2 = jax.random.normal(jax.random.PRNGKey(1), (4, 8, 32, 32), dtype=jnp.float32) * 10.0
    y2 = soft_upper_bound(x2)
    jax.block_until_ready(y2)
    assert jnp.allclose(y2, soft_upper_bound_ref(x2), atol=1e-5, rtol=1e-5)

    # Unaligned element count -> 128-aligned prefix via the kernel + jnp tail.
    x3 = jax.random.normal(jax.random.PRNGKey(2), (3, 50, 3), dtype=jnp.float32) * 10.0
    y3 = soft_upper_bound(x3)
    jax.block_until_ready(y3)
    assert jnp.allclose(y3, soft_upper_bound_ref(x3), atol=1e-5, rtol=1e-5)

    # Fewer than 128 elements -> plain-jnp fallback.
    x4 = jax.random.normal(jax.random.PRNGKey(3), (3, 5, 7), dtype=jnp.float32) * 10.0
    y4 = soft_upper_bound(x4)
    jax.block_until_ready(y4)
    assert jnp.allclose(y4, soft_upper_bound_ref(x4), atol=1e-5, rtol=1e-5)

    # bf16 input: kernel upcasts to f32 internally, casts back on store.
    x5 = (jax.random.normal(jax.random.PRNGKey(4), (2, 4, 16, 16), dtype=jnp.float32) * 10.0
          ).astype(jnp.bfloat16)
    y5 = soft_upper_bound(x5)
    jax.block_until_ready(y5)
    assert y5.dtype == jnp.bfloat16
    assert jnp.allclose(y5.astype(jnp.float32),
                        soft_upper_bound_ref(x5).astype(jnp.float32),
                        atol=5e-2, rtol=5e-2)

    print("KERNEL_OK")
</pallas_src>

<mosaic_0001>
module attributes {stable_mosaic.version = 11 : i64} {
  func.func @_soft_upper_bound_kernel(%arg0: i32, %arg1: memref<8x128xf32, #tpu.memory_space<vmem>>, %arg2: memref<8x128xf32, #tpu.memory_space<vmem>>) attributes {dimension_semantics = [#tpu.dimension_semantics<parallel>], iteration_bounds = array<i64: 2>, scalar_prefetch = 0 : i64, scratch_operands = 0 : i64, tpu.core_type = #tpu.core_type<tc>, window_params = [{transform_indices = @transform_0, window_bounds = array<i64: 8, 128>}, {transform_indices = @transform_1, window_bounds = array<i64: 8, 128>}]} {
    %c0 = arith.constant 0 : index
    %c0_0 = arith.constant 0 : index
    %0 = vector.load %arg1[%c0, %c0_0] : memref<8x128xf32, #tpu.memory_space<vmem>>, vector<8x128xf32>
    %cst = arith.constant 1.000000e+00 : f32
    %1 = vector.broadcast %cst : f32 to vector<8x128xf32>
    %2 = arith.subf %1, %0 : vector<8x128xf32>
    %cst_1 = arith.constant 0.000000e+00 : f32
    %3 = vector.broadcast %cst_1 : f32 to vector<8x128xf32>
    %4 = arith.maximumf %2, %3 : vector<8x128xf32>
    %5 = math.absf %2 : vector<8x128xf32>
    %cst_2 = arith.constant 0.000000e+00 : f32
    %6 = vector.broadcast %cst_2 : f32 to vector<8x128xf32>
    %7 = arith.subf %6, %5 : vector<8x128xf32>
    %8 = math.exp %7 : vector<8x128xf32>
    %9 = math.log1p %8 : vector<8x128xf32>
    %10 = arith.addf %4, %9 : vector<8x128xf32>
    %cst_3 = arith.constant 1.000000e+00 : f32
    %11 = vector.broadcast %cst_3 : f32 to vector<8x128xf32>
    %12 = arith.subf %11, %10 : vector<8x128xf32>
    %c0_4 = arith.constant 0 : index
    %c0_5 = arith.constant 0 : index
    %13 = vector.load %arg2[%c0_4, %c0_5] : memref<8x128xf32, #tpu.memory_space<vmem>>, vector<8x128xf32>
    tpu.vector_store %arg2[%c0_4, %c0_5], %12 {strides = array<i32>} : memref<8x128xf32, #tpu.memory_space<vmem>>, vector<8x128xf32>,
    return
  }
  func.func @transform_0(%arg0: i32) -> (i32, i32) {
    %c0_i32 = arith.constant 0 : i32
    %c0_i32_0 = arith.constant 0 : i32
    return %arg0, %c0_i32 : i32, i32
  }
  func.func @transform_1(%arg0: i32) -> (i32, i32) {
    %c0_i32 = arith.constant 0 : i32
    %c0_i32_0 = arith.constant 0 : i32
    return %arg0, %c0_i32 : i32, i32
  }
}

</mosaic_0001>

<llo_original>
// kernel: tpu_custom_call.1
$region0: #{tpu_custom_call.1}
  #allocation0 [shape = 'u32[]', space=smem, size = 0x4, offset = 0x4, fixed_abs, tag = 'smem constant byte address 0x4 - core index']
  #allocation1 [shape = 'u32[144,128]{1,0:T(1,128)}', space=vmem, size = 0x12000, scoped, tag = 'internal scratch']
  %s0 = inlined_call_operand.hbm [shape: f32[16,128], index: 0, kind: input, shape index: {}]
  %s1 = inlined_call_operand.hbm [shape: f32[16,128], index: 1, kind: output, shape index: {}]
  %s2 = sld [smem:[#allocation0]]
  $region41: #{tpu_custom_call.1} parent=0
    _
  %s4 = ssub.s32 1, %s2
  %s5 = scalar_select 0, %s4, %s2
  $region1: #{tpu_custom_call.1} parent=0
    #allocation2 [shape = 'u8[8192]{0}', space=vmem, size = 0x2000, scoped, tag = 'input window, operand 0']
    #allocation3 [shape = 's32[2]{0}', space=sflag, size = 0x8, scoped, tag = 'scoped memory for tpu_custom_call.1']
    #allocation4 [shape = 's32[2]{0}', space=sflag, size = 0x8, scoped, tag = 'scoped memory for tpu_custom_call.1']
    #allocation5 [shape = 'u8[8192]{0}', space=vmem, size = 0x2000, scoped, tag = 'output window, operand 0']
    %6 = vsyncpa [#allocation3], 0
    %s7 = scalar_lea.sflag [#allocation3], 1
    %8 = vsyncpa %s7, 0
    %9 = vsyncpa [#allocation4], 0
    %s10 = scalar_lea.sflag [#allocation4], 1
    %11 = vsyncpa %s10, 0
    loop: start=0, step=1, limit=4
    $region2: #{tpu_custom_call.1} parent=1 // loop_pre_header
      _
    $region3: #{tpu_custom_call.1} parent=1 // loop_header
      %s13 = sphi 0, %s17
      %p14 = scmp.ge.s32.totalorder %s13, 4
      %s23 = sphi 0, %s25
      %s26 = sphi 0, %s23
      %s27 = sphi 0, %s26
      %s43 = sphi 0, %s27
      %s49 = sphi 0, %s51
      %s52 = sphi 0, %s49
      %s53 = sphi 0, %s52
      %s69 = sphi 0, %s53
    $region4: #{tpu_custom_call.1} parent=1 // loop_header_branch
      %16 = sbr.rel (%p14) target = $region8
    $region5: #{tpu_custom_call.1} parent=1 // loop_body
      %s18 = ssub.s32 %s13, 1
      %s19 = ssub.s32 %s13, 2
      %s20 = sadd.s32 %s13, 1
      %s21 = ssub.s32 %s13, %s20
      %p22 = scmp.eq.s32.totalorder %s21, 0
      %s24 = sadd.s32 %s23, 1
      %s25 = scalar_select %p22, %s23, %s24
      %p28 = pneg %p22
      %p29 = scmp.eq.s32.totalorder %s13, 1
      %p30 = por %p28, %p29
      %p31 = scmp.ne.s32.totalorder %s23, %s26
      %p32 = scmp.eq.s32.totalorder %s13, 0
      %p33 = por %p31, %p32
      %p34 = scmp.ne.s32.totalorder %s23, %s26
      %p35 = scmp.eq.s32.totalorder %s18, 1
      %p36 = por %p34, %p35
      %p37 = scmp.ne.s32.totalorder %s26, %s27
      %p38 = scmp.eq.s32.totalorder %s18, 0
      %p39 = por %p37, %p38
      %p40 = scmp.ne.s32.totalorder %s26, %s27
      %p41 = scmp.eq.s32.totalorder %s19, 1
      %p42 = por %p40, %p41
      %p44 = scmp.ne.s32.totalorder %s27, %s43
      %p45 = scmp.eq.s32.totalorder %s19, 0
      %p46 = por %p44, %p45
      %s47 = ssub.s32 %s13, %s20
      %p48 = scmp.eq.s32.totalorder %s47, 0
      %s50 = sadd.s32 %s49, 1
      %s51 = scalar_select %p48, %s49, %s50
      %p54 = pneg %p48
      %p55 = scmp.eq.s32.totalorder %s13, 1
      %p56 = por %p54, %p55
      %p57 = scmp.ne.s32.totalorder %s49, %s52
      %p58 = scmp.eq.s32.totalorder %s13, 0
      %p59 = por %p57, %p58
      %p60 = scmp.ne.s32.totalorder %s49, %s52
      %p61 = scmp.eq.s32.totalorder %s18, 1
      %p62 = por %p60, %p61
      %p63 = scmp.ne.s32.totalorder %s52, %s53
      %p64 = scmp.eq.s32.totalorder %s18, 0
      %p65 = por %p63, %p64
      %p66 = scmp.ne.s32.totalorder %s52, %s53
      %p67 = scmp.eq.s32.totalorder %s19, 1
      %p68 = por %p66, %p67
      %p70 = scmp.ne.s32.totalorder %s53, %s69
      %p71 = scmp.eq.s32.totalorder %s19, 0
      %p72 = por %p70, %p71
      %p73 = scmp.le.s32.totalorder 1, %s13
      %p74 = scmp.lt.s32.totalorder %s13, 3
      %p75 = pnand %p73, %p74
      %p76 = pneg %p75
      // Predicated region
      $region9: #{tpu_custom_call.1} parent=5 // pred_check
        _
      $region10: #{tpu_custom_call.1} parent=5 // pred_check_branch
        %78 = sbr.rel (%p75) target = $region12
      $region11: #{tpu_custom_call.1} parent=5 // pred_region
        %s79 = ssub.s32 %s13, 1
      $region12: #{tpu_custom_call.1} parent=5 // pred_fallthru
        _
      %p80 = scmp.lt.s32.totalorder %s13, 2
      // Predicated region
      $region13: #{tpu_custom_call.1} parent=5 // pred_check
        %p81 = pneg %p80
      $region14: #{tpu_custom_call.1} parent=5 // pred_check_branch
        %83 = sbr.rel (%p81) target = $region16
      $region15: #{tpu_custom_call.1} parent=5 // pred_region
        // Predicated region
        $region17: #{tpu_custom_call.1} parent=15 // pred_check
          %p84 = pneg %p33
        $region18: #{tpu_custom_call.1} parent=15 // pred_check_branch
          %86 = sbr.rel (%p84) target = $region20
        $region19: #{tpu_custom_call.1} parent=15 // pred_region
          %s87 = sand.u32 %s23, 1
          %s88 = scalar_lea.sflag [#allocation3], %s87
          %s89 = sand.u32 %s23, 1
          %s90 = smul.addr %s89, 8
          %s91 = scalar_lea.vmem [#allocation2], %s90
          %s93 = ssub.s32 128, 128
          %94 = vsyncadd %s88, %s93
          %s95 = smul.addr %s13, 128
          %s96 = scalar_lea.hbm %s0, %s95
          %s98 = sshll.u32 %s91, 4
          %s99 = int_to_ptr.vmem [resolvable:$true] %s98
          %101 = dma.hbm_to_vmem [thread:$0]  %s96, 128, %s99, %s88
        $region20: #{tpu_custom_call.1} parent=15 // pred_fallthru
          _
      $region16: #{tpu_custom_call.1} parent=5 // pred_fallthru
        _
      %p102 = scmp.le.s32.totalorder 1, %s13
      %p103 = scmp.lt.s32.totalorder %s13, 3
      %p104 = pnand %p102, %p103
      %p105 = pneg %p104
      // Predicated region
      $region21: #{tpu_custom_call.1} parent=5 // pred_check
        _
      $region22: #{tpu_custom_call.1} parent=5 // pred_check_branch
        %107 = sbr.rel (%p104) target = $region24
      $region23: #{tpu_custom_call.1} parent=5 // pred_region
        %s108 = ssub.s32 %s13, 1
        %s109 = sand.u32 %s26, 1
        %s110 = scalar_lea.sflag [#allocation3], %s109
        %s111 = sand.u32 %s26, 1
        %s112 = smul.addr %s111, 8
        %s113 = scalar_lea.vmem [#allocation2], %s112
        // Predicated region
        $region25: #{tpu_custom_call.1} parent=23 // pred_check
          %p114 = pneg %p39
        $region26: #{tpu_custom_call.1} parent=23 // pred_check_branch
          %116 = sbr.rel (%p114) target = $region28
        $region27: #{tpu_custom_call.1} parent=23 // pred_region
          %117 = dma.done %s110, 128
        $region28: #{tpu_custom_call.1} parent=23 // pred_fallthru
          _
        %s118 = sand.u32 %s26, 1
        %s119 = scalar_lea.sflag [#allocation3], %s118
        %s120 = sand.u32 %s26, 1
        %s121 = smul.addr %s120, 8
        %s122 = scalar_lea.vmem [#allocation2], %s121
        %p123 = pneg %p39
        %p124 = pneg %p36
        %p125 = pneg %p65
        %p126 = pneg %p62
        %s127 = sand.u32 %s52, 1
        %s128 = scalar_lea.sflag [#allocation4], %s127
        %s129 = sand.u32 %s52, 1
        %s130 = smul.addr %s129, 8
        %s131 = scalar_lea.vmem [#allocation5], %s130
        %v132 = vld [vmem:[%s113] sm:$0xff]
        %v133 = vsub.f32 1.0, %v132
        %v134 = vmax.f32 %v133, 0.0
        %v135 = vand.u32 2147483647, %v133
        %v136 = vsub.f32 0.0, %v135
        %v137 = vmul.f32 %v136, 1.442695
        %v138 = vpow.pop %v137
        %v139 = vadd.f32 %v138, 1.0
        %v140 = vlog2.pop %v139
        %v141 = vmul.f32 %v140, 0.6931472
        %v142 = vmul.f32 -0.5, %v138
        %v143 = vadd.f32 %v142, 1.0
        %v144 = vmul.f32 %v143, %v138
        %v145 = vand.u32 2147483647, %v138
        %vm146 = vcmp.lt.f32.partialorder %v145, 0.0004427343
        %v147 = vsel %vm146, %v144, %v141
        %v148 = vadd.f32 %v134, %v147
        %v149 = vsub.f32 1.0, %v148
        %150 = vst [vmem:[%s131] sm:$0xff] %v149
        %s151 = sand.u32 %s52, 1
        %s152 = scalar_lea.sflag [#allocation4], %s151
        %s153 = sand.u32 %s52, 1
        %s154 = smul.addr %s153, 8
        %s155 = scalar_lea.vmem [#allocation5], %s154
        // Predicated region
        $region29: #{tpu_custom_call.1} parent=23 // pred_check
          %p156 = pneg %p62
        $region30: #{tpu_custom_call.1} parent=23 // pred_check_branch
          %158 = sbr.rel (%p156) target = $region32
        $region31: #{tpu_custom_call.1} parent=23 // pred_region
          %s160 = ssub.s32 128, 128
          %161 = vsyncadd %s152, %s160
          %s162 = smul.addr %s18, 128
          %s163 = scalar_lea.hbm %s1, %s162
          %s165 = sshll.u32 %s155, 4
          %s166 = int_to_ptr.vmem [resolvable:$true] %s165
          %168 = dma.vmem_to_hbm [thread:$0]  %s166, 128, %s163, %s152
        $region32: #{tpu_custom_call.1} parent=23 // pred_fallthru
          _
      $region24: #{tpu_custom_call.1} parent=5 // pred_fallthru
        _
      %p169 = scmp.le.s32.totalorder 2, %s13
      // Predicated region
      $region33: #{tpu_custom_call.1} parent=5 // pred_check
        %p170 = pneg %p169
      $region34: #{tpu_custom_call.1} parent=5 // pred_check_branch
        %172 = sbr.rel (%p170) target = $region36
      $region35: #{tpu_custom_call.1} parent=5 // pred_region
        %s173 = ssub.s32 %s13, 2
        // Predicated region
        $region37: #{tpu_custom_call.1} parent=35 // pred_check
          %p174 = pneg %p68
        $region38: #{tpu_custom_call.1} parent=35 // pred_check_branch
          %176 = sbr.rel (%p174) target = $region40
        $region39: #{tpu_custom_call.1} parent=35 // pred_region
          %s177 = sand.u32 %s53, 1
          %s178 = scalar_lea.sflag [#allocation4], %s177
          %s179 = sand.u32 %s53, 1
          %s180 = smul.addr %s179, 8
          %s181 = scalar_lea.vmem [#allocation5], %s180
          %182 = dma.done %s178, 128
        $region40: #{tpu_custom_call.1} parent=35 // pred_fallthru
          _
      $region36: #{tpu_custom_call.1} parent=5 // pred_fallthru
        _
    $region6: #{tpu_custom_call.1} parent=1 // loop_footer
      %s17 = sadd.s32 1, %s13
    $region7: #{tpu_custom_call.1} parent=1 // loop_footer_branch
      %12 = sbr.rel target = $region3
    $region8: #{tpu_custom_call.1} parent=1 // loop_exit
      _
    %183 = vsyncpa [#allocation3], 1
    %s184 = scalar_lea.sflag [#allocation3], 1
    %185 = vsyncpa %s184, 1
    %186 = vsyncpa [#allocation4], 1
    %s187 = scalar_lea.sflag [#allocation4], 1
    %188 = vsyncpa %s187, 1

</llo_original>
